<compile_context>
chip_gen: v6e
topology: v6e:2x2x1
jax: 0.10.0
libtpu: 0.0.40
codegen_flags: <defaults>
</compile_context>

<pallas_src>
import functools

import jax
import jax.numpy as jnp
from jax.experimental import pallas as pl
from jax.experimental.pallas import tpu as pltpu


def _round_up(v, m):
    return ((v + m - 1) // m) * m


def _dist_features_kernel(x2_ref, proto_ref, psq_ref, temp_ref, o_ref, *, inv_c):
    # x2_ref: [TN, 2C] (native dtype), proto_ref: [2C, TP], psq_ref: [1, TP]
    x2 = x2_ref[...]
    proto = proto_ref[...]

    # Single fused MXU contraction over the stacked real/imag channel axis.
    cross = jnp.dot(x2, proto, preferred_element_type=jnp.float32)     # [TN, TP]

    x_f32 = x2.astype(jnp.float32)
    x_sq = jnp.sum(x_f32 * x_f32, axis=1, keepdims=True)               # [TN, 1]
    proto_sq = psq_ref[...].astype(jnp.float32)                        # [1, TP]

    dist_sq_mean = (proto_sq + x_sq - 2.0 * cross) * jnp.float32(inv_c)
    dist = jnp.sqrt(jnp.maximum(dist_sq_mean, 0.0))

    temp = temp_ref[0]                                                 # SMEM scalar
    o_ref[...] = (-dist * temp).astype(o_ref.dtype)


def dist_features(x, prototypes, temp, *, block_n=256, block_p=512):
    """x: [N, 2, C]; prototypes: [2, C, P]; temp: scalar. Returns [N, P]."""
    # TODO(synk): the optional `y` branch (per-sample complex-rotated
    # prototypes) is not implemented; only the default y=None path is kernelized.
    N, two, C = x.shape
    assert two == 2
    P = prototypes.shape[-1]
    K = 2 * C

    # Fuse real/imag into one contiguous contraction axis (free reshapes; no
    # strided x[:,0,:] / x[:,1,:] slices materialized in HBM).
    x2 = x.reshape(N, K)                                   # [N, 2C]
    proto2 = prototypes.reshape(K, P)                      # [2C, P]

    # Lane-dense prototypes / output: pad P up to a multiple of 128.
    P_pad = _round_up(P, 128)
    if P_pad != P:
        proto2 = jnp.pad(proto2, ((0, 0), (0, P_pad - P)))

    # Hoist ||proto||^2 (channel reduction) out of the kernel.
    proto_sq = jnp.sum(proto2.astype(jnp.float32) ** 2, axis=0, keepdims=True)

    temp_arr = jnp.asarray(temp, jnp.float32).reshape(1)

    bn = _round_up(min(block_n, _round_up(N, 8)), 8)
    bp = min(_round_up(block_p, 128), P_pad)
    n_tiles = pl.cdiv(N, bn)
    p_tiles = pl.cdiv(P_pad, bp)

    kernel = functools.partial(_dist_features_kernel, inv_c=1.0 / C)

    out = pl.pallas_call(
        kernel,
        out_shape=jax.ShapeDtypeStruct((N, P_pad), x.dtype),
        grid_spec=pltpu.PrefetchScalarGridSpec(
            num_scalar_prefetch=0,
            # P-tiles outer, N-tiles inner: the prototype block index is
            # constant along the inner axis, so its DMA is skipped on revisit.
            grid=(p_tiles, n_tiles),
            in_specs=[
                pl.BlockSpec((bn, K), lambda j, i: (i, 0)),         # x (fused)
                pl.BlockSpec((K, bp), lambda j, i: (0, j)),         # prototypes
                pl.BlockSpec((1, bp), lambda j, i: (0, j)),         # ||proto||^2
                pl.BlockSpec(memory_space=pltpu.MemorySpace.SMEM),  # temp scalar
            ],
            out_specs=pl.BlockSpec((bn, bp), lambda j, i: (i, j)),
        ),
        compiler_params=pltpu.CompilerParams(
            dimension_semantics=("parallel", "parallel"),
            vmem_limit_bytes=32 * 1024 * 1024,
        ),
    )(x2, proto2, proto_sq, temp_arr)

    return out[:, :P] if P_pad != P else out


def dist_features_ref(x, prototypes, temp):
    """Pure-JAX reference mirroring the PyTorch forward (y=None)."""
    real = prototypes[None, 0, :, :]              # [1, C, P]
    imag = prototypes[None, 1, :, :]              # [1, C, P]
    a = x[:, 0, :, None]                          # [N, C, 1]
    b = x[:, 1, :, None]                          # [N, C, 1]
    dist_sq = (real - a) ** 2 + (imag - b) ** 2   # [N, C, P]
    dist = jnp.sqrt(dist_sq.mean(axis=1))         # [N, P]
    return -dist * temp


if __name__ == "__main__":
    # Case 1: module-default shapes (single tile).
    k_x, k_p = jax.random.split(jax.random.PRNGKey(0))
    N, C, P = 8, 32, 16
    x = jax.random.normal(k_x, (N, 2, C), dtype=jnp.float32)
    prototypes = jax.random.uniform(k_p, (2, C, P), dtype=jnp.float32)
    temp = jnp.float32(1.0)

    out = jax.block_until_ready(dist_features(x, prototypes, temp))
    ref = dist_features_ref(x, prototypes, temp)
    assert out.shape == (N, P)
    assert jnp.allclose(out, ref, atol=1e-5, rtol=1e-5), (
        f"case1 max abs err {jnp.max(jnp.abs(out - ref))}")

    # Case 2: multi-tile grid with masked edges (N not a multiple of block_n,
    # P padded to 256 and split over two lane tiles).
    k_x2, k_p2 = jax.random.split(jax.random.PRNGKey(1))
    N2, C2, P2 = 40, 32, 200
    x_b = jax.random.normal(k_x2, (N2, 2, C2), dtype=jnp.float32)
    proto_b = jax.random.uniform(k_p2, (2, C2, P2), dtype=jnp.float32)
    temp_b = jnp.float32(0.5)

    out2 = jax.block_until_ready(
        dist_features(x_b, proto_b, temp_b, block_n=16, block_p=128))
    ref2 = dist_features_ref(x_b, proto_b, temp_b)
    assert out2.shape == (N2, P2)
    assert jnp.allclose(out2, ref2, atol=1e-5, rtol=1e-5), (
        f"case2 max abs err {jnp.max(jnp.abs(out2 - ref2))}")

    print("KERNEL_OK")
</pallas_src>

<mosaic_0001>
module attributes {stable_mosaic.version = 11 : i64} {
  func.func @_dist_features_kernel(%arg0: i32, %arg1: i32, %arg2: memref<8x64xf32, #tpu.memory_space<vmem>>, %arg3: memref<64x128xf32, #tpu.memory_space<vmem>>, %arg4: memref<1x128xf32, #tpu.memory_space<vmem>>, %arg5: memref<1xf32, #tpu.memory_space<smem>>, %arg6: memref<8x128xf32, #tpu.memory_space<vmem>>) attributes {dimension_semantics = [#tpu.dimension_semantics<parallel>, #tpu.dimension_semantics<parallel>], iteration_bounds = array<i64: 1, 1>, scalar_prefetch = 0 : i64, scratch_operands = 0 : i64, tpu.core_type = #tpu.core_type<tc>, window_params = [{transform_indices = @transform_0, window_bounds = array<i64: 8, 64>}, {transform_indices = @transform_1, window_bounds = array<i64: 64, 128>}, {transform_indices = @transform_2, window_bounds = array<i64: 1, 128>}, {transform_indices = @transform_3, window_bounds = array<i64: 1>}, {transform_indices = @transform_4, window_bounds = array<i64: 8, 128>}]} {
    %c0 = arith.constant 0 : index
    %c0_0 = arith.constant 0 : index
    %0 = vector.load %arg2[%c0, %c0_0] : memref<8x64xf32, #tpu.memory_space<vmem>>, vector<8x64xf32>
    %c0_1 = arith.constant 0 : index
    %c0_2 = arith.constant 0 : index
    %1 = vector.load %arg3[%c0_1, %c0_2] : memref<64x128xf32, #tpu.memory_space<vmem>>, vector<64x128xf32>
    %cst = arith.constant dense<0.000000e+00> : vector<8x128xf32>
    %2 = tpu.matmul %0, %1, %cst {dimension_numbers = #tpu.dot_dimension_numbers<[1], [0], [0], [1], [0, 0, 1, 1], [], []>} : vector<8x64xf32>, vector<64x128xf32>, vector<8x128xf32> -> vector<8x128xf32>
    %3 = arith.mulf %0, %0 : vector<8x64xf32>
    %cst_3 = arith.constant dense<0.000000e+00> : vector<8xf32>
    %4 = vector.multi_reduction <add>, %3, %cst_3 [1] : vector<8x64xf32> to vector<8xf32>
    %5 = vector.shape_cast %4 : vector<8xf32> to vector<8x1xf32>
    %c0_4 = arith.constant 0 : index
    %c0_5 = arith.constant 0 : index
    %6 = vector.load %arg4[%c0_4, %c0_5] : memref<1x128xf32, #tpu.memory_space<vmem>>, vector<1x128xf32>
    %7 = vector.broadcast %6 : vector<1x128xf32> to vector<8x128xf32>
    %8 = vector.broadcast %5 : vector<8x1xf32> to vector<8x128xf32>
    %9 = arith.addf %7, %8 : vector<8x128xf32>
    %cst_6 = arith.constant 2.000000e+00 : f32
    %10 = vector.broadcast %cst_6 : f32 to vector<8x128xf32>
    %11 = arith.mulf %10, %2 : vector<8x128xf32>
    %12 = arith.subf %9, %11 : vector<8x128xf32>
    %cst_7 = arith.constant 3.125000e-02 : f32
    %13 = vector.broadcast %cst_7 : f32 to vector<8x128xf32>
    %14 = arith.mulf %12, %13 : vector<8x128xf32>
    %cst_8 = arith.constant 0.000000e+00 : f32
    %15 = vector.broadcast %cst_8 : f32 to vector<8x128xf32>
    %16 = arith.maximumf %14, %15 : vector<8x128xf32>
    %17 = math.sqrt %16 : vector<8x128xf32>
    %c0_9 = arith.constant 0 : index
    %18 = memref.load %arg5[%c0_9] : memref<1xf32, #tpu.memory_space<smem>>
    %cst_10 = arith.constant 0.000000e+00 : f32
    %19 = vector.broadcast %cst_10 : f32 to vector<8x128xf32>
    %20 = arith.subf %19, %17 : vector<8x128xf32>
    %21 = vector.broadcast %18 : f32 to vector<8x128xf32>
    %22 = arith.mulf %20, %21 : vector<8x128xf32>
    %c0_11 = arith.constant 0 : index
    %c0_12 = arith.constant 0 : index
    %23 = vector.load %arg6[%c0_11, %c0_12] : memref<8x128xf32, #tpu.memory_space<vmem>>, vector<8x128xf32>
    tpu.vector_store %arg6[%c0_11, %c0_12], %22 {strides = array<i32>} : memref<8x128xf32, #tpu.memory_space<vmem>>, vector<8x128xf32>,
    return
  }
  func.func @transform_0(%arg0: i32, %arg1: i32) -> (i32, i32) {
    %c0_i32 = arith.constant 0 : i32
    %c0_i32_0 = arith.constant 0 : i32
    return %arg1, %c0_i32 : i32, i32
  }
  func.func @transform_1(%arg0: i32, %arg1: i32) -> (i32, i32) {
    %c0_i32 = arith.constant 0 : i32
    %c0_i32_0 = arith.constant 0 : i32
    return %c0_i32, %arg0 : i32, i32
  }
  func.func @transform_2(%arg0: i32, %arg1: i32) -> (i32, i32) {
    %c0_i32 = arith.constant 0 : i32
    %c0_i32_0 = arith.constant 0 : i32
    return %c0_i32, %arg0 : i32, i32
  }
  func.func @transform_3(%arg0: i32, %arg1: i32) -> i32 {
    %c0_i32 = arith.constant 0 : i32
    %c0_i32_0 = arith.constant 0 : i32
    return %c0_i32 : i32
  }
  func.func @transform_4(%arg0: i32, %arg1: i32) -> (i32, i32) {
    %c0_i32 = arith.constant 0 : i32
    return %arg1, %arg0 : i32, i32
  }
}

</mosaic_0001>

<llo_original>
// kernel: tpu_custom_call.1
$region0: #{tpu_custom_call.1}
  #allocation0 [shape = 'u32[]', space=smem, size = 0x4, offset = 0x4, fixed_abs, tag = 'smem constant byte address 0x4 - core index']
  #allocation1 [shape = 'u32[144,128]{1,0:T(1,128)}', space=vmem, size = 0x12000, scoped, tag = 'internal scratch']
  #allocation2 [shape = 'f32[1]{0:T(128)S(6)}', space=smem, size = 0x200, scoped, tag = 'scoped memory for tpu_custom_call.1']
  %s0 = inlined_call_operand.hbm [shape: f32[8,64], index: 0, kind: input, shape index: {}]
  %s1 = inlined_call_operand.hbm [shape: f32[64,128], index: 1, kind: input, shape index: {}]
  %s2 = inlined_call_operand.vmem [shape: f32[1,128], index: 2, kind: input, shape index: {}]
  %s3 = inlined_call_operand.<no memory space> [shape: f32[1], index: 3, kind: input, shape index: {}]
  %s4 = inlined_call_operand.hbm [shape: f32[8,128], index: 4, kind: output, shape index: {}]
  %s5 = sld [smem:[#allocation0]]
  $region34: #{tpu_custom_call.1} parent=0
    _
  %s7 = ssub.s32 1, %s5
  %s8 = scalar_select 0, %s7, %s5
  %9 = sst [smem:[#allocation2]] %s3
  $region1: #{tpu_custom_call.1} parent=0
    #allocation3 [shape = 'u8[4096]{0}', space=vmem, size = 0x1000, scoped, tag = 'input window, operand 0, single buffered']
    #allocation4 [shape = 's32[1]{0}', space=sflag, size = 0x4, scoped, tag = 'scoped memory for tpu_custom_call.1']
    #allocation5 [shape = 's32[1]{0}', space=sflag, size = 0x4, scoped, tag = 'scoped memory for tpu_custom_call.1']
    #allocation6 [shape = 'u8[32768]{0}', space=vmem, size = 0x8000, scoped, tag = 'input window, operand 1, single buffered']
    #allocation7 [shape = 's32[1]{0}', space=sflag, size = 0x4, scoped, tag = 'scoped memory for tpu_custom_call.1']
    #allocation8 [shape = 'u8[4096]{0}', space=vmem, size = 0x1000, scoped, tag = 'output window, operand 0, single buffered']
    %10 = vsyncpa [#allocation4], 0
    %11 = vsyncpa [#allocation7], 0
    %12 = vsyncpa [#allocation5], 0
    // Predicated region
    $region2: #{tpu_custom_call.1} parent=1 // pred_check
      _
    $region3: #{tpu_custom_call.1} parent=1 // pred_check_branch
      %14 = sbr.rel (0) target = $region5
    $region4: #{tpu_custom_call.1} parent=1 // pred_region
      %s16 = ssub.s32 128, 128
      %17 = vsyncadd [#allocation4], %s16
      %s19 = sshll.u32 [#allocation3], 4
      %s20 = int_to_ptr.vmem [resolvable:$true] %s19
      %22 = dma.hbm_to_vmem [thread:$0]  %s0, 128, %s20, [#allocation4]
    $region5: #{tpu_custom_call.1} parent=1 // pred_fallthru
      _
    // Predicated region
    $region6: #{tpu_custom_call.1} parent=1 // pred_check
      _
    $region7: #{tpu_custom_call.1} parent=1 // pred_check_branch
      %24 = sbr.rel (0) target = $region9
    $region8: #{tpu_custom_call.1} parent=1 // pred_region
      %s26 = ssub.s32 1024, 1024
      %27 = vsyncadd [#allocation7], %s26
      %s28 = sshll.u32 [#allocation6], 4
      %s29 = int_to_ptr.vmem [resolvable:$true] %s28
      %34 = dma.hbm_to_vmem [thread:$0]  %s1, 1024, %s29, [#allocation7], 128, 128, 8
    $region9: #{tpu_custom_call.1} parent=1 // pred_fallthru
      _
    // Predicated region
    $region10: #{tpu_custom_call.1} parent=1 // pred_check
      _
    $region11: #{tpu_custom_call.1} parent=1 // pred_check_branch
      %36 = sbr.rel (0) target = $region13
    $region12: #{tpu_custom_call.1} parent=1 // pred_region
      _
    $region13: #{tpu_custom_call.1} parent=1 // pred_fallthru
      _
    // Predicated region
    $region14: #{tpu_custom_call.1} parent=1 // pred_check
      _
    $region15: #{tpu_custom_call.1} parent=1 // pred_check_branch
      %38 = sbr.rel (0) target = $region17
    $region16: #{tpu_custom_call.1} parent=1 // pred_region
      _
    $region17: #{tpu_custom_call.1} parent=1 // pred_fallthru
      _
    // Predicated region
    $region18: #{tpu_custom_call.1} parent=1 // pred_check
      _
    $region19: #{tpu_custom_call.1} parent=1 // pred_check_branch
      %40 = sbr.rel (0) target = $region21
    $region20: #{tpu_custom_call.1} parent=1 // pred_region
      %41 = dma.done [#allocation4], 128
    $region21: #{tpu_custom_call.1} parent=1 // pred_fallthru
      _
    // Predicated region
    $region22: #{tpu_custom_call.1} parent=1 // pred_check
      _
    $region23: #{tpu_custom_call.1} parent=1 // pred_check_branch
      %43 = sbr.rel (0) target = $region25
    $region24: #{tpu_custom_call.1} parent=1 // pred_region
      %44 = dma.done [#allocation7], 1024
    $region25: #{tpu_custom_call.1} parent=1 // pred_fallthru
      _
    %v45 = vld [vmem:[#allocation3] sm:$0xff]
    %v46 = vld [vmem:[#allocation6] sm:$0xff]
    %v47 = vld [vmem:[#allocation6 + $0x8] sm:$0xff]
    %v48 = vld [vmem:[#allocation6 + $0x10] sm:$0xff]
    %v49 = vld [vmem:[#allocation6 + $0x18] sm:$0xff]
    %v50 = vld [vmem:[#allocation6 + $0x20] sm:$0xff]
    %v51 = vld [vmem:[#allocation6 + $0x28] sm:$0xff]
    %v52 = vld [vmem:[#allocation6 + $0x30] sm:$0xff]
    %v53 = vld [vmem:[#allocation6 + $0x38] sm:$0xff]
    %vm54 = vcmask 523264
    %v56 = vsel %vm54, %v45, 0
    %58 = vmatprep.subr.mxu0 0.0
    %59 = vmatpush1.msra.mxu0 0.0
    %60 = vmatprep.subr.mxu0 0.0
    %61 = vmatpush1.msra.mxu0 0.0
    %62 = vmatprep.subr.mxu0 0.0
    %63 = vmatpush1.msra.mxu0 0.0
    %64 = vmatprep.subr.mxu0 0.0
    %65 = vmatpush1.msra.mxu0 0.0
    %66 = vmatprep.subr.mxu0 0.0
    %67 = vmatpush1.msra.mxu0 0.0
    %68 = vmatprep.subr.mxu0 0.0
    %69 = vmatpush1.msra.mxu0 0.0
    %70 = vmatprep.subr.mxu0 0.0
    %71 = vmatpush1.msra.mxu0 0.0
    %72 = vmatprep.subr.mxu0 0.0
    %73 = vmatpush1.msra.mxu0 0.0
    %74 = vmatprep.subr.mxu0 0.0
    %75 = vmatpush1.msra.mxu0 %v53
    %76 = vmatprep.subr.mxu0 0.0
    %77 = vmatpush1.msra.mxu0 %v52
    %78 = vmatprep.subr.mxu0 0.0
    %79 = vmatpush1.msra.mxu0 %v51
    %80 = vmatprep.subr.mxu0 0.0
    %81 = vmatpush1.msra.mxu0 %v50
    %82 = vmatprep.subr.mxu0 0.0
    %83 = vmatpush1.msra.mxu0 %v49
    %84 = vmatprep.subr.mxu0 0.0
    %85 = vmatpush1.msra.mxu0 %v48
    %86 = vmatprep.subr.mxu0 0.0
    %87 = vmatpush1.msra.mxu0 %v47
    %88 = vmatprep.subr.mxu0 0.0
    %89 = vmatpush1.msra.mxu0 %v46
    %90 = vmatprep.subr.mxu0 0.0
    %91 = vmatpush2.msra.mxu0 0.0
    %92 = vmatprep.subr.mxu0 0.0
    %93 = vmatpush2.msra.mxu0 0.0
    %94 = vmatprep.subr.mxu0 0.0
    %95 = vmatpush2.msra.mxu0 0.0
    %96 = vmatprep.subr.mxu0 0.0
    %97 = vmatpush2.msra.mxu0 0.0
    %98 = vmatprep.subr.mxu0 0.0
    %99 = vmatpush2.msra.mxu0 0.0
    %100 = vmatprep.subr.mxu0 0.0
    %101 = vmatpush2.msra.mxu0 0.0
    %102 = vmatprep.subr.mxu0 0.0
    %103 = vmatpush2.msra.mxu0 0.0
    %104 = vmatprep.subr.mxu0 0.0
    %105 = vmatpush2.msra.mxu0 0.0
    %106 = vmatprep.subr.mxu0 0.0
    %107 = vmatpush2.msra.mxu0 0.0
    %108 = vmatprep.subr.mxu0 0.0
    %109 = vmatpush2.msra.mxu0 0.0
    %110 = vmatprep.subr.mxu0 0.0
    %111 = vmatpush2.msra.mxu0 0.0
    %112 = vmatprep.subr.mxu0 0.0
    %113 = vmatpush2.msra.mxu0 0.0
    %114 = vmatprep.subr.mxu0 0.0
    %115 = vmatpush2.msra.mxu0 0.0
    %116 = vmatprep.subr.mxu0 0.0
    %117 = vmatpush2.msra.mxu0 0.0
    %118 = vmatprep.subr.mxu0 0.0
    %119 = vmatpush2.msra.mxu0 0.0
    %120 = vmatprep.subr.mxu0 0.0
    %121 = vmatpush2.msra.mxu0 0.0
    %122 = vmatprep.mubr.f32.mxu0 0.0
    %123 = vmatmul.mubr.f32.gmra.mxu0 %v56
    %v124 = vpop.f32.mrf.mxu0
    %v125 = vadd.f32 0.0, %v124
    %v126 = vpop.f32.mrf.mxu0
    %127 = vdwg.mxu0
    %v128 = vmul.f32 %v45, %v45
    %v129 = vsel %vm54, %v128, 0.0
    %130 = vadd.xlane.f32.xlu0 %v129
    %v131 = vpop.xlane.xlu0 %130
    %v132 = vld [vmem:[%s2] sm:$0x1]
    %v134 = vlaneseq
    %v135 = vshrl.u32 %v134, 7
    %v136 = vsub.s32 0, %v135
    %v137 = vrot.slane %v132, %v136
    %v139 = vadd.f32 %v137, %v131
    %v140 = vmul.f32 %v125, 2.0
    %v141 = vsub.f32 %v139, %v140
    %v142 = vmul.f32 %v141, 0.03125
    %v143 = vmax.f32 %v142, 0.0
    %v144 = vrsqrt.pop %v143
    %v145 = vmul.f32 %v143, %v144
    %vm146 = vcmp.eq.f32.partialorder %v143, inf
    %v147 = vsel %vm146, %v143, %v145
    %vm148 = vcmp.eq.f32.partialorder %v143, 0.0
    %v149 = vand.u32 %v143, 2147483648
    %v150 = vsel %vm148, %v149, %v147
    %s151 = sld [smem:[#allocation2]]
    %v152 = vsub.f32 0.0, %v150
    %v153 = vstv %s151
    %v154 = vmul.f32 %v152, %v153
    %155 = vst [vmem:[#allocation8] sm:$0xff] %v154
    // Predicated region
    $region26: #{tpu_custom_call.1} parent=1 // pred_check
      _
    $region27: #{tpu_custom_call.1} parent=1 // pred_check_branch
      %157 = sbr.rel (0) target = $region29
    $region28: #{tpu_custom_call.1} parent=1 // pred_region
      %s159 = ssub.s32 128, 128
      %160 = vsyncadd [#allocation5], %s159
      %s162 = sshll.u32 [#allocation8], 4
      %s163 = int_to_ptr.vmem [resolvable:$true] %s162
      %165 = dma.vmem_to_hbm [thread:$0]  %s163, 128, %s4, [#allocation5]
    $region29: #{tpu_custom_call.1} parent=1 // pred_fallthru
      _
    // Predicated region
    $region30: #{tpu_custom_call.1} parent=1 // pred_check
      _
    $region31: #{tpu_custom_call.1} parent=1 // pred_check_branch
      %167 = sbr.rel (0) target = $region33
    $region32: #{tpu_custom_call.1} parent=1 // pred_region
      %168 = dma.done [#allocation5], 128
    $region33: #{tpu_custom_call.1} parent=1 // pred_fallthru
      _
    %169 = vsyncpa [#allocation4], 1
    %170 = vsyncpa [#allocation7], 1
    %171 = vsyncpa [#allocation5], 1

</llo_original>
